<compile_context>
chip_gen: v6e
topology: v6e:2x2x1
jax: 0.10.0
libtpu: 0.0.40
codegen_flags: <defaults>
</compile_context>

<pallas_src>
import functools
import math

import jax
import jax.numpy as jnp
from jax import lax
from jax.experimental import pallas as pl
from jax.experimental.pallas import tpu as pltpu

_INV_SQRT2 = 1.0 / math.sqrt(2.0)


def _gelu_exact(x):
    # PyTorch F.gelu default: 0.5 * x * (1 + erf(x / sqrt(2)))  (exact, erf-based)
    # TODO(synk): if VALU-bound, consider jax.nn.gelu(approximate=True) (tanh on
    # the EUP slot) -- differs from PyTorch's exact-erf default at ~1e-3.
    return 0.5 * x * (1.0 + lax.erf(x * _INV_SQRT2))


def mlp_kernel(x_ref, w1_ref, b1_ref, w2_ref, b2_ref, o_ref, acc_ref):
    # Grid: (M tiles, F tiles). Axis 1 (F) is the reduction axis.
    # x_ref : (tm, H)    w1_ref: (H, tf)   b1_ref: (1, tf)
    # w2_ref: (tf, H)    b2_ref: (1, H)    o_ref : (tm, H)
    # acc_ref: (tm, H) f32 accumulator, persistent across the F axis.
    f = pl.program_id(1)

    @pl.when(f == 0)
    def _init():
        acc_ref[...] = jnp.zeros_like(acc_ref)

    # proj1 tile: native-dtype operands into the MXU, f32 accumulation.
    h = jnp.dot(x_ref[...], w1_ref[...], preferred_element_type=jnp.float32)
    h = _gelu_exact(h + b1_ref[...].astype(jnp.float32))
    # drop1: identity (inference mode)

    # proj2 partial sum over this F tile, accumulated in f32 scratch.
    acc_ref[...] += jnp.dot(h.astype(w2_ref.dtype), w2_ref[...],
                            preferred_element_type=jnp.float32)

    @pl.when(f == pl.num_programs(1) - 1)
    def _epilogue():
        y = _gelu_exact(acc_ref[...] + b2_ref[...].astype(jnp.float32))
        # drop2: identity (inference mode)
        o_ref[...] = y.astype(o_ref.dtype)


@functools.partial(jax.jit, static_argnames=("tm", "tf"))
def mlp_forward(x, w1, b1, w2, b2, *, tm=512, tf=512):
    """x: (batch, seq, hidden). w1: (H, F), b1: (F,), w2: (F, H), b2: (H,).

    Weights should already be in the desired compute dtype (e.g. bf16) --
    pre-cast once outside the kernel, never per tile inside it.
    """
    batch, seq, hidden = x.shape
    mlp_size = w1.shape[1]
    M = batch * seq
    x2d = x.reshape(M, hidden)

    tm = min(tm, M)
    tf = min(tf, mlp_size)
    assert M % tm == 0, "batch*seq must be divisible by the row tile"
    assert mlp_size % tf == 0, "mlp_size must be divisible by the F tile"
    # TODO(synk): ragged M / F would need padding or a masked tail tile.

    b1_2d = b1.reshape(1, mlp_size)
    b2_2d = b2.reshape(1, hidden)

    # VMEM budget: double-buffered tiles + f32 accumulator + headroom,
    # capped below v7x's 64 MiB physical VMEM.
    itemsize = jnp.dtype(x.dtype).itemsize
    tile_bytes = (
        tm * hidden * itemsize          # x tile
        + hidden * tf * itemsize        # W1 tile
        + tf * itemsize                 # b1 tile
        + tf * hidden * itemsize        # W2 tile
        + hidden * itemsize             # b2
        + tm * hidden * itemsize        # out tile
    )
    vmem_bytes = 2 * tile_bytes + tm * hidden * 4 + (4 << 20)
    vmem_bytes = int(min(max(vmem_bytes, 16 << 20), 64 << 20))

    out2d = pl.pallas_call(
        mlp_kernel,
        out_shape=jax.ShapeDtypeStruct((M, hidden), x.dtype),
        grid_spec=pltpu.PrefetchScalarGridSpec(
            num_scalar_prefetch=0,
            grid=(M // tm, mlp_size // tf),
            in_specs=[
                pl.BlockSpec((tm, hidden), lambda i, f: (i, 0)),   # x tile
                pl.BlockSpec((hidden, tf), lambda i, f: (0, f)),   # W1 column tile
                pl.BlockSpec((1, tf), lambda i, f: (0, f)),        # b1 tile
                pl.BlockSpec((tf, hidden), lambda i, f: (f, 0)),   # W2 row tile
                pl.BlockSpec((1, hidden), lambda i, f: (0, 0)),    # b2
            ],
            out_specs=pl.BlockSpec((tm, hidden), lambda i, f: (i, 0)),
            scratch_shapes=[pltpu.VMEM((tm, hidden), jnp.float32)],
        ),
        compiler_params=pltpu.CompilerParams(
            dimension_semantics=("parallel", "arbitrary"),
            vmem_limit_bytes=vmem_bytes),
    )(x2d, w1, b1_2d, w2, b2_2d)

    return out2d.reshape(batch, seq, hidden)


def init_params(key, hidden_size, mlp_size, dtype=jnp.float32):
    """nn.Linear-style init (uniform +/- 1/sqrt(fan_in)); weights stored (in, out)."""
    k1, k2, k3, k4 = jax.random.split(key, 4)
    bound1 = 1.0 / math.sqrt(hidden_size)
    bound2 = 1.0 / math.sqrt(mlp_size)
    w1 = jax.random.uniform(k1, (hidden_size, mlp_size), dtype, -bound1, bound1)
    b1 = jax.random.uniform(k2, (mlp_size,), dtype, -bound1, bound1)
    w2 = jax.random.uniform(k3, (mlp_size, hidden_size), dtype, -bound2, bound2)
    b2 = jax.random.uniform(k4, (hidden_size,), dtype, -bound2, bound2)
    return w1, b1, w2, b2


def mlp_reference(x, w1, b1, w2, b2):
    h = _gelu_exact(jnp.einsum("bsh,hf->bsf", x, w1) + b1)
    y = _gelu_exact(jnp.einsum("bsf,fh->bsh", h, w2) + b2)
    return y


if __name__ == "__main__":
    # Small demo shapes: M = batch*seq = 128 rows; tf=256 -> 2 F-reduction steps.
    batch, seq, hidden, mlp = 2, 64, 128, 512

    key = jax.random.PRNGKey(0)
    kx, kp = jax.random.split(key)
    x = jax.random.normal(kx, (batch, seq, hidden), jnp.float32)
    w1, b1, w2, b2 = init_params(kp, hidden, mlp, dtype=jnp.float32)

    # f32 path (strict check against reference).
    out = mlp_forward(x, w1, b1, w2, b2, tm=512, tf=256)
    out = jax.block_until_ready(out)
    ref = mlp_reference(x, w1, b1, w2, b2)
    assert out.shape == (batch, seq, hidden)
    assert jnp.allclose(out, ref, atol=1e-4, rtol=1e-4), "f32 mismatch vs reference"

    # bf16 path: native-dtype operands straight into the MXU (no in-kernel upcasts).
    xb = x.astype(jnp.bfloat16)
    w1b, b1b, w2b, b2b = (t.astype(jnp.bfloat16) for t in (w1, b1, w2, b2))
    out_bf16 = jax.block_until_ready(
        mlp_forward(xb, w1b, b1b, w2b, b2b, tm=512, tf=256))
    ref_bf16 = mlp_reference(xb.astype(jnp.float32), w1b.astype(jnp.float32),
                             b1b.astype(jnp.float32), w2b.astype(jnp.float32),
                             b2b.astype(jnp.float32))
    assert out_bf16.shape == (batch, seq, hidden)
    assert jnp.allclose(out_bf16.astype(jnp.float32), ref_bf16,
                        atol=1e-1, rtol=1e-1), "bf16 mismatch vs reference"

    print("KERNEL_OK")
</pallas_src>

<mosaic_0001>
module attributes {stable_mosaic.version = 11 : i64} {
  func.func @mlp_kernel(%arg0: i32, %arg1: i32, %arg2: memref<128x128xf32, #tpu.memory_space<vmem>>, %arg3: memref<128x256xf32, #tpu.memory_space<vmem>>, %arg4: memref<1x256xf32, #tpu.memory_space<vmem>>, %arg5: memref<256x128xf32, #tpu.memory_space<vmem>>, %arg6: memref<1x128xf32, #tpu.memory_space<vmem>>, %arg7: memref<128x128xf32, #tpu.memory_space<vmem>>, %arg8: memref<128x128xf32, #tpu.memory_space<vmem>>) attributes {dimension_semantics = [#tpu.dimension_semantics<parallel>, #tpu.dimension_semantics<arbitrary>], iteration_bounds = array<i64: 1, 2>, scalar_prefetch = 0 : i64, scratch_operands = 1 : i64, tpu.core_type = #tpu.core_type<tc>, window_params = [{transform_indices = @transform_0, window_bounds = array<i64: 128, 128>}, {transform_indices = @transform_1, window_bounds = array<i64: 128, 256>}, {transform_indices = @transform_2, window_bounds = array<i64: 1, 256>}, {transform_indices = @transform_3, window_bounds = array<i64: 256, 128>}, {pipeline_mode = #tpu.pipeline_mode<synchronous>, transform_indices = @transform_4, window_bounds = array<i64: 1, 128>}, {transform_indices = @transform_5, window_bounds = array<i64: 128, 128>}]} {
    %c0_i32 = arith.constant 0 : i32
    %0 = arith.cmpi eq, %arg1, %c0_i32 : i32
    %1 = arith.extui %0 : i1 to i32
    %c0_i32_0 = arith.constant 0 : i32
    %2 = arith.cmpi ne, %1, %c0_i32_0 : i32
    scf.if %2 {
      %cst_17 = arith.constant 0.000000e+00 : f32
      %25 = vector.broadcast %cst_17 : f32 to vector<128x128xf32>
      %c0_18 = arith.constant 0 : index
      %c0_19 = arith.constant 0 : index
      %26 = vector.load %arg8[%c0_18, %c0_19] : memref<128x128xf32, #tpu.memory_space<vmem>>, vector<128x128xf32>
      tpu.vector_store %arg8[%c0_18, %c0_19], %25 {strides = array<i32>} : memref<128x128xf32, #tpu.memory_space<vmem>>, vector<128x128xf32>,
    } else {
    }
    %c0 = arith.constant 0 : index
    %c0_1 = arith.constant 0 : index
    %3 = vector.load %arg2[%c0, %c0_1] : memref<128x128xf32, #tpu.memory_space<vmem>>, vector<128x128xf32>
    %c0_2 = arith.constant 0 : index
    %c0_3 = arith.constant 0 : index
    %4 = vector.load %arg3[%c0_2, %c0_3] : memref<128x256xf32, #tpu.memory_space<vmem>>, vector<128x256xf32>
    %cst = arith.constant dense<0.000000e+00> : vector<128x256xf32>
    %5 = tpu.matmul %3, %4, %cst {dimension_numbers = #tpu.dot_dimension_numbers<[1], [0], [0], [1], [0, 0, 1, 1], [], []>} : vector<128x128xf32>, vector<128x256xf32>, vector<128x256xf32> -> vector<128x256xf32>
    %c0_4 = arith.constant 0 : index
    %c0_5 = arith.constant 0 : index
    %6 = vector.load %arg4[%c0_4, %c0_5] : memref<1x256xf32, #tpu.memory_space<vmem>>, vector<1x256xf32>
    %7 = vector.broadcast %6 : vector<1x256xf32> to vector<128x256xf32>
    %8 = arith.addf %5, %7 : vector<128x256xf32>
    %cst_6 = arith.constant 5.000000e-01 : f32
    %9 = vector.broadcast %cst_6 : f32 to vector<128x256xf32>
    %10 = arith.mulf %9, %8 : vector<128x256xf32>
    %cst_7 = arith.constant 0.707106769 : f32
    %11 = vector.broadcast %cst_7 : f32 to vector<128x256xf32>
    %12 = arith.mulf %8, %11 : vector<128x256xf32>
    %13 = math.erf %12 : vector<128x256xf32>
    %cst_8 = arith.constant 1.000000e+00 : f32
    %14 = vector.broadcast %cst_8 : f32 to vector<128x256xf32>
    %15 = arith.addf %14, %13 : vector<128x256xf32>
    %16 = arith.mulf %10, %15 : vector<128x256xf32>
    %c0_9 = arith.constant 0 : index
    %c0_10 = arith.constant 0 : index
    %17 = vector.load %arg8[%c0_9, %c0_10] : memref<128x128xf32, #tpu.memory_space<vmem>>, vector<128x128xf32>
    %c0_11 = arith.constant 0 : index
    %c0_12 = arith.constant 0 : index
    %18 = vector.load %arg5[%c0_11, %c0_12] : memref<256x128xf32, #tpu.memory_space<vmem>>, vector<256x128xf32>
    %cst_13 = arith.constant dense<0.000000e+00> : vector<128x128xf32>
    %19 = tpu.matmul %16, %18, %cst_13 {dimension_numbers = #tpu.dot_dimension_numbers<[1], [0], [0], [1], [0, 0, 1, 1], [], []>} : vector<128x256xf32>, vector<256x128xf32>, vector<128x128xf32> -> vector<128x128xf32>
    %20 = arith.addf %17, %19 : vector<128x128xf32>
    %c0_14 = arith.constant 0 : index
    %c0_15 = arith.constant 0 : index
    %21 = vector.load %arg8[%c0_14, %c0_15] : memref<128x128xf32, #tpu.memory_space<vmem>>, vector<128x128xf32>
    tpu.vector_store %arg8[%c0_14, %c0_15], %20 {strides = array<i32>} : memref<128x128xf32, #tpu.memory_space<vmem>>, vector<128x128xf32>,
    %c1_i32 = arith.constant 1 : i32
    %22 = arith.cmpi eq, %arg1, %c1_i32 : i32
    %23 = arith.extui %22 : i1 to i32
    %c0_i32_16 = arith.constant 0 : i32
    %24 = arith.cmpi ne, %23, %c0_i32_16 : i32
    scf.if %24 {
      %c0_17 = arith.constant 0 : index
      %c0_18 = arith.constant 0 : index
      %25 = vector.load %arg8[%c0_17, %c0_18] : memref<128x128xf32, #tpu.memory_space<vmem>>, vector<128x128xf32>
      %c0_19 = arith.constant 0 : index
      %c0_20 = arith.constant 0 : index
      %26 = vector.load %arg6[%c0_19, %c0_20] : memref<1x128xf32, #tpu.memory_space<vmem>>, vector<1x128xf32>
      %27 = vector.broadcast %26 : vector<1x128xf32> to vector<128x128xf32>
      %28 = arith.addf %25, %27 : vector<128x128xf32>
      %cst_21 = arith.constant 5.000000e-01 : f32
      %29 = vector.broadcast %cst_21 : f32 to vector<128x128xf32>
      %30 = arith.mulf %29, %28 : vector<128x128xf32>
      %cst_22 = arith.constant 0.707106769 : f32
      %31 = vector.broadcast %cst_22 : f32 to vector<128x128xf32>
      %32 = arith.mulf %28, %31 : vector<128x128xf32>
      %33 = math.erf %32 : vector<128x128xf32>
      %cst_23 = arith.constant 1.000000e+00 : f32
      %34 = vector.broadcast %cst_23 : f32 to vector<128x128xf32>
      %35 = arith.addf %34, %33 : vector<128x128xf32>
      %36 = arith.mulf %30, %35 : vector<128x128xf32>
      %c0_24 = arith.constant 0 : index
      %c0_25 = arith.constant 0 : index
      %37 = vector.load %arg7[%c0_24, %c0_25] : memref<128x128xf32, #tpu.memory_space<vmem>>, vector<128x128xf32>
      tpu.vector_store %arg7[%c0_24, %c0_25], %36 {strides = array<i32>} : memref<128x128xf32, #tpu.memory_space<vmem>>, vector<128x128xf32>,
    } else {
    }
    return
  }
  func.func @transform_0(%arg0: i32, %arg1: i32) -> (i32, i32) {
    %c0_i32 = arith.constant 0 : i32
    %c0_i32_0 = arith.constant 0 : i32
    return %arg0, %c0_i32 : i32, i32
  }
  func.func @transform_1(%arg0: i32, %arg1: i32) -> (i32, i32) {
    %c0_i32 = arith.constant 0 : i32
    %c0_i32_0 = arith.constant 0 : i32
    return %c0_i32, %arg1 : i32, i32
  }
  func.func @transform_2(%arg0: i32, %arg1: i32) -> (i32, i32) {
    %c0_i32 = arith.constant 0 : i32
    %c0_i32_0 = arith.constant 0 : i32
    return %c0_i32, %arg1 : i32, i32
  }
  func.func @transform_3(%arg0: i32, %arg1: i32) -> (i32, i32) {
    %c0_i32 = arith.constant 0 : i32
    %c0_i32_0 = arith.constant 0 : i32
    return %arg1, %c0_i32 : i32, i32
  }
  func.func @transform_4(%arg0: i32, %arg1: i32) -> (i32, i32) {
    %c0_i32 = arith.constant 0 : i32
    %c0_i32_0 = arith.constant 0 : i32
    %c0_i32_1 = arith.constant 0 : i32
    return %c0_i32, %c0_i32_0 : i32, i32
  }
  func.func @transform_5(%arg0: i32, %arg1: i32) -> (i32, i32) {
    %c0_i32 = arith.constant 0 : i32
    %c0_i32_0 = arith.constant 0 : i32
    return %arg0, %c0_i32 : i32, i32
  }
}

</mosaic_0001>

<llo_original>
// kernel: mlp_forward.1
$region0: #{mlp_forward.1}
  #allocation0 [shape = 'u32[]', space=smem, size = 0x4, offset = 0x4, fixed_abs, tag = 'smem constant byte address 0x4 - core index']
  #allocation1 [shape = 'u32[144,128]{1,0:T(1,128)}', space=vmem, size = 0x12000, scoped, tag = 'internal scratch']
  #allocation2 [shape = 'f32[128,128]{1,0:T(8,128)}', space=vmem, size = 0x10000, scoped, tag = 'scratch operand']
  %s0 = inlined_call_operand.hbm [shape: f32[128,128], index: 0, kind: input, shape index: {}]
  %s1 = inlined_call_operand.hbm [shape: f32[128,512], index: 1, kind: input, shape index: {}]
  %s2 = inlined_call_operand.vmem [shape: f32[1,512], index: 2, kind: input, shape index: {}]
  %s3 = inlined_call_operand.hbm [shape: f32[512,128], index: 3, kind: input, shape index: {}]
  %s4 = inlined_call_operand.vmem [shape: f32[1,128], index: 4, kind: input, shape index: {}]
  %s5 = inlined_call_operand.hbm [shape: f32[128,128], index: 5, kind: output, shape index: {}]
  %s6 = sld [smem:[#allocation0]]
  $region73: #{mlp_forward.1} parent=0
    _
  %s8 = ssub.s32 1, %s6
  %s9 = scalar_select 0, %s8, %s6
  $region1: #{mlp_forward.1} parent=0
    #allocation3 [shape = 'u8[65536]{0}', space=vmem, size = 0x10000, scoped, tag = 'input window, operand 0, single buffered']
    #allocation4 [shape = 's32[2]{0}', space=sflag, size = 0x8, scoped, tag = 'scoped memory for mlp_forward.1']
    #allocation5 [shape = 's32[2]{0}', space=sflag, size = 0x8, scoped, tag = 'scoped memory for mlp_forward.1']
    #allocation6 [shape = 'u8[262144]{0}', space=vmem, size = 0x40000, scoped, tag = 'input window, operand 1']
    #allocation7 [shape = 's32[2]{0}', space=sflag, size = 0x8, scoped, tag = 'scoped memory for mlp_forward.1']
    #allocation8 [shape = 'u8[262144]{0}', space=vmem, size = 0x40000, scoped, tag = 'input window, operand 3']
    #allocation9 [shape = 'u8[65536]{0}', space=vmem, size = 0x10000, scoped, tag = 'output window, operand 0, single buffered']
    %10 = vsyncpa [#allocation4], 0
    %11 = vsyncpa [#allocation7], 0
    %s12 = scalar_lea.sflag [#allocation7], 1
    %13 = vsyncpa %s12, 0
    %14 = vsyncpa [#allocation5], 0
    loop: start=0, step=1, limit=4
    $region2: #{mlp_forward.1} parent=1 // loop_pre_header
      _
    $region3: #{mlp_forward.1} parent=1 // loop_header
      %s16 = sphi 0, %s20
      %p17 = scmp.ge.s32.totalorder %s16, 4
      %s23 = sphi 0, %s35
      %s24 = sphi 0, %s31
      %s25 = sphi 0, %s23
      %s26 = sphi 0, %s24
      %s27 = sphi 0, %s25
      %s28 = sphi 0, %s26
      %s38 = sphi 0, %s40
      %s41 = sphi 0, %s38
      %s42 = sphi 0, %s41
      %s58 = sphi 0, %s42
      %s64 = sphi 0, %s66
      %s67 = sphi 0, %s64
      %s68 = sphi 0, %s67
      %s84 = sphi 0, %s68
      %s90 = sphi 0, %s92
      %s93 = sphi 0, %s90
      %s94 = sphi 0, %s93
      %s110 = sphi 0, %s94
      %s116 = sphi 0, %s118
      %s119 = sphi 0, %s116
      %s120 = sphi 0, %s119
      %s136 = sphi 0, %s120
      %s140 = sphi 0, %s140
      %s142 = sphi 0, %s140
      %s143 = sphi 0, %s142
      %s157 = sphi 0, %s143
      %s163 = sphi 0, %s165
      %s166 = sphi 0, %s163
      %s167 = sphi 0, %s166
      %s183 = sphi 0, %s167
    $region4: #{mlp_forward.1} parent=1 // loop_header_branch
      %19 = sbr.rel (%p17) target = $region8
    $region5: #{mlp_forward.1} parent=1 // loop_body
      %s21 = ssub.s32 %s16, 1
      %s22 = ssub.s32 %s16, 2
      %s29 = sadd.s32 1, %s24
      %p30 = scmp.ge.s32.totalorder %s29, 2
      %s31 = scalar_select %p30, 0, %s29
      %s32 = sadd.s32 1, %s23
      %s33 = scalar_select %p30, %s32, %s23
      %p34 = scmp.ge.s32.totalorder %s33, 1
      %s35 = scalar_select %p34, 0, %s33
      %s36 = ssub.s32 %s23, %s35
      %p37 = scmp.eq.s32.totalorder %s36, 0
      %s39 = sadd.s32 %s38, 1
      %s40 = scalar_select %p37, %s38, %s39
      %p43 = pneg %p37
      %p44 = scmp.eq.s32.totalorder %s16, 1
      %p45 = por %p43, %p44
      %p46 = scmp.ne.s32.totalorder %s38, %s41
      %p47 = scmp.eq.s32.totalorder %s16, 0
      %p48 = por %p46, %p47
      %p49 = scmp.ne.s32.totalorder %s38, %s41
      %p50 = scmp.eq.s32.totalorder %s21, 1
      %p51 = por %p49, %p50
      %p52 = scmp.ne.s32.totalorder %s41, %s42
      %p53 = scmp.eq.s32.totalorder %s21, 0
      %p54 = por %p52, %p53
      %p55 = scmp.ne.s32.totalorder %s41, %s42
      %p56 = scmp.eq.s32.totalorder %s22, 1
      %p57 = por %p55, %p56
      %p59 = scmp.ne.s32.totalorder %s42, %s58
      %p60 = scmp.eq.s32.totalorder %s22, 0
      %p61 = por %p59, %p60
      %s62 = ssub.s32 %s24, %s31
      %p63 = scmp.eq.s32.totalorder %s62, 0
      %s65 = sadd.s32 %s64, 1
      %s66 = scalar_select %p63, %s64, %s65
      %p69 = pneg %p63
      %p70 = scmp.eq.s32.totalorder %s16, 1
      %p71 = por %p69, %p70
      %p72 = scmp.ne.s32.totalorder %s64, %s67
      %p73 = scmp.eq.s32.totalorder %s16, 0
      %p74 = por %p72, %p73
      %p75 = scmp.ne.s32.totalorder %s64, %s67
      %p76 = scmp.eq.s32.totalorder %s21, 1
      %p77 = por %p75, %p76
      %p78 = scmp.ne.s32.totalorder %s67, %s68
      %p79 = scmp.eq.s32.totalorder %s21, 0
      %p80 = por %p78, %p79
      %p81 = scmp.ne.s32.totalorder %s67, %s68
      %p82 = scmp.eq.s32.totalorder %s22, 1
      %p83 = por %p81, %p82
      %p85 = scmp.ne.s32.totalorder %s68, %s84
      %p86 = scmp.eq.s32.totalorder %s22, 0
      %p87 = por %p85, %p86
      %s88 = ssub.s32 %s24, %s31
      %p89 = scmp.eq.s32.totalorder %s88, 0
      %s91 = sadd.s32 %s90, 1
      %s92 = scalar_select %p89, %s90, %s91
      %p95 = pneg %p89
      %p96 = scmp.eq.s32.totalorder %s16, 1
      %p97 = por %p95, %p96
      %p98 = scmp.ne.s32.totalorder %s90, %s93
      %p99 = scmp.eq.s32.totalorder %s16, 0
      %p100 = por %p98, %p99
      %p101 = scmp.ne.s32.totalorder %s90, %s93
      %p102 = scmp.eq.s32.totalorder %s21, 1
      %p103 = por %p101, %p102
      %p104 = scmp.ne.s32.totalorder %s93, %s94
      %p105 = scmp.eq.s32.totalorder %s21, 0
      %p106 = por %p104, %p105
      %p107 = scmp.ne.s32.totalorder %s93, %s94
      %p108 = scmp.eq.s32.totalorder %s22, 1
      %p109 = por %p107, %p108
      %p111 = scmp.ne.s32.totalorder %s94, %s110
      %p112 = scmp.eq.s32.totalorder %s22, 0
      %p113 = por %p111, %p112
      %s114 = ssub.s32 %s24, %s31
      %p115 = scmp.eq.s32.totalorder %s114, 0
      %s117 = sadd.s32 %s116, 1
      %s118 = scalar_select %p115, %s116, %s117
      %p121 = pneg %p115
      %p122 = scmp.eq.s32.totalorder %s16, 1
      %p123 = por %p121, %p122
      %p124 = scmp.ne.s32.totalorder %s116, %s119
      %p125 = scmp.eq.s32.totalorder %s16, 0
      %p126 = por %p124, %p125
      %p127 = scmp.ne.s32.totalorder %s116, %s119
      %p128 = scmp.eq.s32.totalorder %s21, 1
      %p129 = por %p127, %p128
      %p130 = scmp.ne.s32.totalorder %s119, %s120
      %p131 = scmp.eq.s32.totalorder %s21, 0
      %p132 = por %p130, %p131
      %p133 = scmp.ne.s32.totalorder %s119, %s120
      %p134 = scmp.eq.s32.totalorder %s22, 1
      %p135 = por %p133, %p134
      %p137 = scmp.ne.s32.totalorder %s120, %s136
      %p138 = scmp.eq.s32.totalorder %s22, 0
      %p139 = por %p137, %p138
      %s141 = sadd.s32 %s140, 1
      %p144 = scmp.eq.s32.totalorder %s16, 1
      %p145 = scmp.ne.s32.totalorder %s140, %s142
      %p146 = scmp.eq.s32.totalorder %s16, 0
      %p147 = por %p145, %p146
      %p148 = scmp.ne.s32.totalorder %s140, %s142
      %p149 = scmp.eq.s32.totalorder %s21, 1
      %p150 = por %p148, %p149
      %p151 = scmp.ne.s32.totalorder %s142, %s143
      %p152 = scmp.eq.s32.totalorder %s21, 0
      %p153 = por %p151, %p152
      %p154 = scmp.ne.s32.totalorder %s142, %s143
      %p155 = scmp.eq.s32.totalorder %s22, 1
      %p156 = por %p154, %p155
      %p158 = scmp.ne.s32.totalorder %s143, %s157
      %p159 = scmp.eq.s32.totalorder %s22, 0
      %p160 = por %p158, %p159
      %s161 = ssub.s32 %s23, %s35
      %p162 = scmp.eq.s32.totalorder %s161, 0
      %s164 = sadd.s32 %s163, 1
      %s165 = scalar_select %p162, %s163, %s164
      %p168 = pneg %p162
      %p169 = scmp.eq.s32.totalorder %s16, 1
      %p170 = por %p168, %p169
      %p171 = scmp.ne.s32.totalorder %s163, %s166
      %p172 = scmp.eq.s32.totalorder %s16, 0
      %p173 = por %p171, %p172
      %p174 = scmp.ne.s32.totalorder %s163, %s166
      %p175 = scmp.eq.s32.totalorder %s21, 1
      %p176 = por %p174, %p175
      %p177 = scmp.ne.s32.totalorder %s166, %s167
      %p178 = scmp.eq.s32.totalorder %s21, 0
      %p179 = por %p177, %p178
      %p180 = scmp.ne.s32.totalorder %s166, %s167
      %p181 = scmp.eq.s32.totalorder %s22, 1
      %p182 = por %p180, %p181
      %p184 = scmp.ne.s32.totalorder %s167, %s183
      %p185 = scmp.eq.s32.totalorder %s22, 0
      %p186 = por %p184, %p185
      %p187 = scmp.le.s32.totalorder 1, %s16
      %p188 = scmp.lt.s32.totalorder %s16, 3
      %p189 = pnand %p187, %p188
      %p190 = pneg %p189
      // Predicated region
      $region9: #{mlp_forward.1} parent=5 // pred_check
        _
      $region10: #{mlp_forward.1} parent=5 // pred_check_branch
        %192 = sbr.rel (%p189) target = $region12
      $region11: #{mlp_forward.1} parent=5 // pred_region
        %s193 = ssub.s32 %s16, 1
        // Predicated region
        $region13: #{mlp_forward.1} parent=11 // pred_check
          %p194 = pneg %p54
        $region14: #{mlp_forward.1} parent=11 // pred_check_branch
          %196 = sbr.rel (%p194) target = $region16
        $region15: #{mlp_forward.1} parent=11 // pred_region
          %s197 = smul.u32 16, %s25
          %s199 = ssub.s32 2048, 2048
          %200 = vsyncadd [#allocation4], %s199
          %s201 = smul.addr %s197, 128
          %s202 = scalar_lea.hbm %s0, %s201
          %s203 = sshll.u32 [#allocation3], 4
          %s204 = int_to_ptr.vmem [resolvable:$true] %s203
          %209 = dma.hbm_to_vmem [thread:$0]  %s202, 2048, %s204, [#allocation4], 128, 128, 8
        $region16: #{mlp_forward.1} parent=11 // pred_fallthru
          _
        // Predicated region
        $region17: #{mlp_forward.1} parent=11 // pred_check
          %p210 = pneg %p153
        $region18: #{mlp_forward.1} parent=11 // pred_check_branch
          %212 = sbr.rel (%p210) target = $region20
        $region19: #{mlp_forward.1} parent=11 // pred_region
          _
        $region20: #{mlp_forward.1} parent=11 // pred_fallthru
          _
      $region12: #{mlp_forward.1} parent=5 // pred_fallthru
        _
      %p213 = scmp.lt.s32.totalorder %s16, 2
      // Predicated region
      $region21: #{mlp_forward.1} parent=5 // pred_check
        %p214 = pneg %p213
      $region22: #{mlp_forward.1} parent=5 // pred_check_branch
        %216 = sbr.rel (%p214) target = $region24
      $region23: #{mlp_forward.1} parent=5 // pred_region
        // Predicated region
        $region25: #{mlp_forward.1} parent=23 // pred_check
          %p217 = pneg %p74
        $region26: #{mlp_forward.1} parent=23 // pred_check_branch
          %219 = sbr.rel (%p217) target = $region28
        $region27: #{mlp_forward.1} parent=23 // pred_region
          %s220 = sand.u32 %s16, 1
          %s221 = scalar_lea.sflag [#allocation7], %s220
          %s222 = sand.u32 %s64, 1
          %s223 = smul.addr %s222, 256
          %s224 = scalar_lea.vmem [#allocation6], %s223
          %s225 = smul.u32 2, %s24
          %s227 = ssub.s32 4096, 4096
          %228 = vsyncadd %s221, %s227
          %s229 = smul.addr %s225, 128
          %s230 = scalar_lea.hbm %s1, %s229
          %s231 = sshll.u32 %s224, 4
          %s232 = int_to_ptr.vmem [resolvable:$true] %s231
          %237 = dma.hbm_to_vmem [thread:$0]  %s230, 4096, %s232, %s221, 512, 256, 16
        $region28: #{mlp_forward.1} parent=23 // pred_fallthru
          _
        // Predicated region
        $region29: #{mlp_forward.1} parent=23 // pred_check
          %p238 = pneg %p100
        $region30: #{mlp_forward.1} parent=23 // pred_check_branch
          %240 = sbr.rel (%p238) target = $region32
        $region31: #{mlp_forward.1} parent=23 // pred_region
          %s241 = smul.u32 2, %s24
          %p242 = scmp.lt.s32.totalorder %s241, 3
          %s243 = scalar_select %p242, %s241, 3
          %s244 = scalar_lea.vmem %s2, %s243
          %s245 = smul.u32 2, %s24
        $region32: #{mlp_forward.1} parent=23 // pred_fallthru
          _
        // Predicated region
        $region33: #{mlp_forward.1} parent=23 // pred_check
          %p246 = pneg %p126
        $region34: #{mlp_forward.1} parent=23 // pred_check_branch
          %248 = sbr.rel (%p246) target = $region36
        $region35: #{mlp_forward.1} parent=23 // pred_region
          %s249 = sand.u32 %s16, 1
          %s250 = scalar_lea.sflag [#allocation7], %s249
          %s251 = sand.u32 %s116, 1
          %s252 = smul.addr %s251, 256
          %s253 = scalar_lea.vmem [#allocation8], %s252
          %s254 = smul.u32 32, %s24
          %s256 = ssub.s32 4096, 4096
          %257 = vsyncadd %s250, %s256
          %s258 = smul.addr %s254, 128
          %s259 = scalar_lea.hbm %s3, %s258
          %s260 = sshll.u32 %s253, 4
          %s261 = int_to_ptr.vmem [resolvable:$true] %s260
          %266 = dma.hbm_to_vmem [thread:$0]  %s259, 4096, %s261, %s250, 128, 128, 8
        $region36: #{mlp_forward.1} parent=23 // pred_fallthru
          _
      $region24: #{mlp_forward.1} parent=5 // pred_fallthru
        _
      %p267 = scmp.le.s32.totalorder 1, %s16
      %p268 = scmp.lt.s32.totalorder %s16, 3
      %p269 = pnand %p267, %p268
      %p270 = pneg %p269
      // Predicated region
      $region37: #{mlp_forward.1} parent=5 // pred_check
        _
      $region38: #{mlp_forward.1} parent=5 // pred_check_branch
        %272 = sbr.rel (%p269) target = $region40
      $region39: #{mlp_forward.1} parent=5 // pred_region
        %s273 = ssub.s32 %s16, 1
        // Predicated region
        $region41: #{mlp_forward.1} parent=39 // pred_check
          %p274 = pneg %p54
        $region42: #{mlp_forward.1} parent=39 // pred_check_branch
          %276 = sbr.rel (%p274) target = $region44
        $region43: #{mlp_forward.1} parent=39 // pred_region
          %277 = dma.done [#allocation4], 2048
        $region44: #{mlp_forward.1} parent=39 // pred_fallthru
          _
        %s278 = sand.u32 %s21, 1
        %s279 = scalar_lea.sflag [#allocation7], %s278
        %s280 = sand.u32 %s67, 1
        %s281 = smul.addr %s280, 256
        %s282 = scalar_lea.vmem [#allocation6], %s281
        // Predicated region
        $region45: #{mlp_forward.1} parent=39 // pred_check
          %p283 = pneg %p80
        $region46: #{mlp_forward.1} parent=39 // pred_check_branch
          %285 = sbr.rel (%p283) target = $region48
        $region47: #{mlp_forward.1} parent=39 // pred_region
          %286 = dma.done %s279, 4096
        $region48: #{mlp_forward.1} parent=39 // pred_fallthru
          _
        %s287 = sand.u32 %s21, 1
        %s288 = scalar_lea.sflag [#allocation7], %s287
        %s289 = sand.u32 %s119, 1
        %s290 = smul.addr %s289, 256
        %s291 = scalar_lea.vmem [#allocation8], %s290
        // Predicated region
        $region49: #{mlp_forward.1} parent=39 // pred_check
          %p292 = pneg %p132
        $region50: #{mlp_forward.1} parent=39 // pred_check_branch
          %294 = sbr.rel (%p292) target = $region52
        $region51: #{mlp_forward.1} parent=39 // pred_region
          %295 = dma.done %s288, 4096
        $region52: #{mlp_forward.1} parent=39 // pred_fallthru
          _
        %p296 = pneg %p54
        %p297 = pneg %p51
        %s298 = sand.u32 %s21, 1
        %s299 = scalar_lea.sflag [#allocation7], %s298
        %s300 = sand.u32 %s67, 1
        %s301 = smul.addr %s300, 256
        %s302 = scalar_lea.vmem [#allocation6], %s301
        %p303 = pneg %p80
        %p304 = pneg %p77
        %s305 = smul.u32 2, %s26
        %p306 = scmp.lt.s32.totalorder %s305, 3
        %s307 = scalar_select %p306, %s305, 3
        %s308 = scalar_lea.vmem %s2, %s307
        %p309 = pneg %p106
        %p310 = pneg %p103
        %s311 = sand.u32 %s21, 1
        %s312 = scalar_lea.sflag [#allocation7], %s311
        %s313 = sand.u32 %s119, 1
        %s314 = smul.addr %s313, 256
        %s315 = scalar_lea.vmem [#allocation8], %s314
        %p316 = pneg %p132
        %p317 = pneg %p129
        %p318 = pneg %p153
        %p319 = pneg %p150
        %p320 = pneg %p179
        %p321 = pneg %p176
        %s322 = smul.u32 16, %s25
        %s323 = smul.u32 2, %s26
        %s324 = smul.u32 2, %s26
        %p325 = scmp.lt.s32.totalorder %s324, 3
        %s326 = scalar_select %p325, %s324, 3
        %s327 = scalar_lea.vmem %s2, %s326
        %s328 = smul.u32 2, %s26
        %s329 = smul.u32 32, %s26
        %s330 = smul.u32 16, %s25
        %p331 = scmp.eq.s32.totalorder %s26, 0
        // Predicated region
        $region53: #{mlp_forward.1} parent=39 // pred_check
          %p332 = pneg %p331
        $region54: #{mlp_forward.1} parent=39 // pred_check_branch
          %334 = sbr.rel (%p332) target = $region56
        $region55: #{mlp_forward.1} parent=39 // pred_region
          %335 = vst [vmem:[#allocation2] sm:$0xff] 0.0
          %336 = vst [vmem:[#allocation2 + $0x8] sm:$0xff] 0.0
          %337 = vst [vmem:[#allocation2 + $0x10] sm:$0xff] 0.0
          %338 = vst [vmem:[#allocation2 + $0x18] sm:$0xff] 0.0
          %339 = vst [vmem:[#allocation2 + $0x20] sm:$0xff] 0.0
          %340 = vst [vmem:[#allocation2 + $0x28] sm:$0xff] 0.0
          %341 = vst [vmem:[#allocation2 + $0x30] sm:$0xff] 0.0
          %342 = vst [vmem:[#allocation2 + $0x38] sm:$0xff] 0.0
          %343 = vst [vmem:[#allocation2 + $0x40] sm:$0xff] 0.0
          %344 = vst [vmem:[#allocation2 + $0x48] sm:$0xff] 0.0
          %345 = vst [vmem:[#allocation2 + $0x50] sm:$0xff] 0.0
          %346 = vst [vmem:[#allocation2 + $0x58] sm:$0xff] 0.0
          %347 = vst [vmem:[#allocation2 + $0x60] sm:$0xff] 0.0
          %348 = vst [vmem:[#allocation2 + $0x68] sm:$0xff] 0.0
          %349 = vst [vmem:[#allocation2 + $0x70] sm:$0xff] 0.0
          %350 = vst [vmem:[#allocation2 + $0x78] sm:$0xff] 0.0
        $region56: #{mlp_forward.1} parent=39 // pred_fallthru
          _
        %v351 = vld [vmem:[#allocation3] sm:$0xff]
        %v352 = vld [vmem:[#allocation3 + $0x8] sm:$0xff]
        %v353 = vld [vmem:[#allocation3 + $0x10] sm:$0xff]
        %v354 = vld [vmem:[#allocation3 + $0x18] sm:$0xff]
        %v355 = vld [vmem:[#allocation3 + $0x20] sm:$0xff]
        %v356 = vld [vmem:[#allocation3 + $0x28] sm:$0xff]
        %v357 = vld [vmem:[#allocation3 + $0x30] sm:$0xff]
        %v358 = vld [vmem:[#allocation3 + $0x38] sm:$0xff]
        %v359 = vld [vmem:[#allocation3 + $0x40] sm:$0xff]
        %v360 = vld [vmem:[#allocation3 + $0x48] sm:$0xff]
        %v361 = vld [vmem:[#allocation3 + $0x50] sm:$0xff]
        %v362 = vld [vmem:[#allocation3 + $0x58] sm:$0xff]
        %v363 = vld [vmem:[#allocation3 + $0x60] sm:$0xff]
        %v364 = vld [vmem:[#allocation3 + $0x68] sm:$0xff]
        %v365 = vld [vmem:[#allocation3 + $0x70] sm:$0xff]
        %v366 = vld [vmem:[#allocation3 + $0x78] sm:$0xff]
        %v367 = vld [vmem:[%s282] sm:$0xff]
        %v368 = vld [vmem:[%s282 + $0x8] sm:$0xff]
        %v369 = vld [vmem:[%s282 + $0x10] sm:$0xff]
        %v370 = vld [vmem:[%s282 + $0x18] sm:$0xff]
        %v371 = vld [vmem:[%s282 + $0x20] sm:$0xff]
        %v372 = vld [vmem:[%s282 + $0x28] sm:$0xff]
        %v373 = vld [vmem:[%s282 + $0x30] sm:$0xff]
        %v374 = vld [vmem:[%s282 + $0x38] sm:$0xff]
        %v375 = vld [vmem:[%s282 + $0x40] sm:$0xff]
        %v376 = vld [vmem:[%s282 + $0x48] sm:$0xff]
        %v377 = vld [vmem:[%s282 + $0x50] sm:$0xff]
        %v378 = vld [vmem:[%s282 + $0x58] sm:$0xff]
        %v379 = vld [vmem:[%s282 + $0x60] sm:$0xff]
        %v380 = vld [vmem:[%s282 + $0x68] sm:$0xff]
        %v381 = vld [vmem:[%s282 + $0x70] sm:$0xff]
        %v382 = vld [vmem:[%s282 + $0x78] sm:$0xff]
        %v383 = vld [vmem:[%s282 + $0x80] sm:$0xff]
        %v384 = vld [vmem:[%s282 + $0x88] sm:$0xff]
        %v385 = vld [vmem:[%s282 + $0x90] sm:$0xff]
        %v386 = vld [vmem:[%s282 + $0x98] sm:$0xff]
        %v387 = vld [vmem:[%s282 + $0xa0] sm:$0xff]
        %v388 = vld [vmem:[%s282 + $0xa8] sm:$0xff]
        %v389 = vld [vmem:[%s282 + $0xb0] sm:$0xff]
        %v390 = vld [vmem:[%s282 + $0xb8] sm:$0xff]
        %v391 = vld [vmem:[%s282 + $0xc0] sm:$0xff]
        %v392 = vld [vmem:[%s282 + $0xc8] sm:$0xff]
        %v393 = vld [vmem:[%s282 + $0xd0] sm:$0xff]
        %v394 = vld [vmem:[%s282 + $0xd8] sm:$0xff]
        %v395 = vld [vmem:[%s282 + $0xe0] sm:$0xff]
        %v396 = vld [vmem:[%s282 + $0xe8] sm:$0xff]
        %v397 = vld [vmem:[%s282 + $0xf0] sm:$0xff]
        %v398 = vld [vmem:[%s282 + $0xf8] sm:$0xff]
        %v399 = vld [vmem:[%s327] sm:$0x3]
        %v401 = vlaneseq
        %v402 = vshrl.u32 %v401, 7
        %v403 = vsub.s32 0, %v402
        %v404 = vrot.slane %v399, %v403
        %v405 = vlaneseq
        %v406 = vshrl.u32 %v405, 7
        %v407 = vsub.s32 1, %v406
        %v408 = vrot.slane %v399, %v407
        %411 = vmatprep.subr.mxu0 %v398
        %412 = vmatpush1.msra.mxu0 %v397
        %413 = vmatprep.subr.mxu0 %v396
        %414 = vmatpush1.msra.mxu0 %v395
        %415 = vmatprep.subr.mxu0 %v394
        %416 = vmatpush1.msra.mxu0 %v393
        %417 = vmatprep.subr.mxu0 %v392
        %418 = vmatpush1.msra.mxu0 %v391
        %419 = vmatprep.subr.mxu0 %v390
        %420 = vmatpush1.msra.mxu0 %v389
        %421 = vmatprep.subr.mxu0 %v388
        %422 = vmatpush1.msra.mxu0 %v387
        %423 = vmatprep.subr.mxu0 %v386
        %424 = vmatpush1.msra.mxu0 %v385
        %425 = vmatprep.subr.mxu0 %v384
        %426 = vmatpush1.msra.mxu0 %v383
        %427 = vmatprep.subr.mxu0 %v382
        %428 = vmatpush1.msra.mxu0 %v381
        %429 = vmatprep.subr.mxu0 %v380
        %430 = vmatpush1.msra.mxu0 %v379
        %431 = vmatprep.subr.mxu0 %v378
        %432 = vmatpush1.msra.mxu0 %v377
        %433 = vmatprep.subr.mxu0 %v376
        %434 = vmatpush1.msra.mxu0 %v375
        %435 = vmatprep.subr.mxu0 %v374
        %436 = vmatpush1.msra.mxu0 %v373
        %437 = vmatprep.subr.mxu0 %v372
        %438 = vmatpush1.msra.mxu0 %v371
        %439 = vmatprep.subr.mxu0 %v370
        %440 = vmatpush1.msra.mxu0 %v369
        %441 = vmatprep.subr.mxu0 %v368
        %442 = vmatpush1.msra.mxu0 %v367
        %443 = vmatprep.subr.mxu0 0.0
        %444 = vmatpush2.msra.mxu0 0.0
        %445 = vmatprep.subr.mxu0 0.0
        %446 = vmatpush2.msra.mxu0 0.0
        %447 = vmatprep.subr.mxu0 0.0
        %448 = vmatpush2.msra.mxu0 0.0
        %449 = vmatprep.subr.mxu0 0.0
        %450 = vmatpush2.msra.mxu0 0.0
        %451 = vmatprep.subr.mxu0 0.0
        %452 = vmatpush2.msra.mxu0 0.0
        %453 = vmatprep.subr.mxu0 0.0
        %454 = vmatpush2.msra.mxu0 0.0
        %455 = vmatprep.subr.mxu0 0.0
        %456 = vmatpush2.msra.mxu0 0.0
        %457 = vmatprep.subr.mxu0 0.0
        %458 = vmatpush2.msra.mxu0 0.0
        %459 = vmatprep.subr.mxu0 0.0
        %460 = vmatpush2.msra.mxu0 0.0
        %461 = vmatprep.subr.mxu0 0.0
        %462 = vmatpush2.msra.mxu0 0.0
        %463 = vmatprep.subr.mxu0 0.0
        %464 = vmatpush2.msra.mxu0 0.0
        %465 = vmatprep.subr.mxu0 0.0
        %466 = vmatpush2.msra.mxu0 0.0
        %467 = vmatprep.subr.mxu0 0.0
        %468 = vmatpush2.msra.mxu0 0.0
        %469 = vmatprep.subr.mxu0 0.0
        %470 = vmatpush2.msra.mxu0 0.0
        %471 = vmatprep.subr.mxu0 0.0
        %472 = vmatpush2.msra.mxu0 0.0
        %473 = vmatprep.subr.mxu0 0.0
        %474 = vmatpush2.msra.mxu0 0.0
        %475 = vmatprep.mubr.f32.mxu0 0.0
        %476 = vmatmul.mubr.f32.gmra.mxu0 %v351
        %v477 = vpop.f32.mrf.mxu0
        %v478 = vadd.f32 %v404, %v477
        %v479 = vpop.f32.mrf.mxu0
        %v480 = vadd.f32 %v408, %v479
        %481 = vmatprep.mubr.f32.mxu0 0.0
        %482 = vmatmul.mubr.f32.gmra.mxu0 %v352
        %v483 = vpop.f32.mrf.mxu0
        %v484 = vadd.f32 %v404, %v483
        %v485 = vpop.f32.mrf.mxu0
        %v486 = vadd.f32 %v408, %v485
        %487 = vmatprep.mubr.f32.mxu0 0.0
        %488 = vmatmul.mubr.f32.gmra.mxu0 %v353
        %v489 = vpop.f32.mrf.mxu0
        %v490 = vadd.f32 %v404, %v489
        %v491 = vpop.f32.mrf.mxu0
        %v492 = vadd.f32 %v408, %v491
        %493 = vmatprep.mubr.f32.mxu0 0.0
        %494 = vmatmul.mubr.f32.gmra.mxu0 %v354
        %v495 = vpop.f32.mrf.mxu0
        %v496 = vadd.f32 %v404, %v495
        %v497 = vpop.f32.mrf.mxu0
        %v498 = vadd.f32 %v408, %v497
        %499 = vmatprep.mubr.f32.mxu0 0.0
        %500 = vmatmul.mubr.f32.gmra.mxu0 %v355
        %v501 = vpop.f32.mrf.mxu0
        %v502 = vadd.f32 %v404, %v501
        %v503 = vpop.f32.mrf.mxu0
        %v504 = vadd.f32 %v408, %v503
        %505 = vmatprep.mubr.f32.mxu0 0.0
        %506 = vmatmul.mubr.f32.gmra.mxu0 %v356
        %v507 = vpop.f32.mrf.mxu0
        %v508 = vadd.f32 %v404, %v507
        %v509 = vpop.f32.mrf.mxu0
        %v510 = vadd.f32 %v408, %v509
        %511 = vmatprep.mubr.f32.mxu0 0.0
        %512 = vmatmul.mubr.f32.gmra.mxu0 %v357
        %v513 = vpop.f32.mrf.mxu0
        %v514 = vadd.f32 %v404, %v513
        %v515 = vpop.f32.mrf.mxu0
        %v516 = vadd.f32 %v408, %v515
        %517 = vmatprep.mubr.f32.mxu0 0.0
        %518 = vmatmul.mubr.f32.gmra.mxu0 %v358
        %v519 = vpop.f32.mrf.mxu0
        %v520 = vadd.f32 %v404, %v519
        %v521 = vpop.f32.mrf.mxu0
        %v522 = vadd.f32 %v408, %v521
        %523 = vmatprep.mubr.f32.mxu0 0.0
        %524 = vmatmul.mubr.f32.gmra.mxu0 %v359
        %v525 = vpop.f32.mrf.mxu0
        %v526 = vadd.f32 %v404, %v525
        %v527 = vpop.f32.mrf.mxu0
        %v528 = vadd.f32 %v408, %v527
        %529 = vmatprep.mubr.f32.mxu0 0.0
        %530 = vmatmul.mubr.f32.gmra.mxu0 %v360
        %v531 = vpop.f32.mrf.mxu0
        %v532 = vadd.f32 %v404, %v531
        %v533 = vpop.f32.mrf.mxu0
        %v534 = vadd.f32 %v408, %v533
        %535 = vmatprep.mubr.f32.mxu0 0.0
        %536 = vmatmul.mubr.f32.gmra.mxu0 %v361
        %v537 = vpop.f32.mrf.mxu0
        %v538 = vadd.f32 %v404, %v537
        %v539 = vpop.f32.mrf.mxu0
        %v540 = vadd.f32 %v408, %v539
        %541 = vmatprep.mubr.f32.mxu0 0.0
        %542 = vmatmul.mubr.f32.gmra.mxu0 %v362
        %v543 = vpop.f32.mrf.mxu0
        %v544 = vadd.f32 %v404, %v543
        %v545 = vpop.f32.mrf.mxu0
        %v546 = vadd.f32 %v408, %v545
        %547 = vmatprep.mubr.f32.mxu0 0.0
        %548 = vmatmul.mubr.f32.gmra.mxu0 %v363
        %v549 = vpop.f32.mrf.mxu0
        %v550 = vadd.f32 %v404, %v549
        %v551 = vpop.f32.mrf.mxu0
        %v552 = vadd.f32 %v408, %v551
        %553 = vmatprep.mubr.f32.mxu0 0.0
        %554 = vmatmul.mubr.f32.gmra.mxu0 %v364
        %v555 = vpop.f32.mrf.mxu0
        %v556 = vadd.f32 %v404, %v555
        %v557 = vpop.f32.mrf.mxu0
        %v558 = vadd.f32 %v408, %v557
        %559 = vmatprep.mubr.f32.mxu0 0.0
        %560 = vmatmul.mubr.f32.gmra.mxu0 %v365
        %v561 = vpop.f32.mrf.mxu0
        %v562 = vadd.f32 %v404, %v561
        %v563 = vpop.f32.mrf.mxu0
        %v564 = vadd.f32 %v408, %v563
        %565 = vmatprep.mubr.f32.mxu0 0.0
        %566 = vmatmul.mubr.f32.gmra.mxu0 %v366
        %v567 = vpop.f32.mrf.mxu0
        %v568 = vadd.f32 %v404, %v567
        %v569 = vpop.f32.mrf.mxu0
        %v570 = vadd.f32 %v408, %v569
        %571 = vdwg.mxu0
        %v572 = vmul.f32 %v478, 0.5
        %v573 = vmul.f32 %v480, 0.5
        %v574 = vmul.f32 %v484, 0.5
        %v575 = vmul.f32 %v486, 0.5
        %v576 = vmul.f32 %v490, 0.5
        %v577 = vmul.f32 %v492, 0.5
        %v578 = vmul.f32 %v496, 0.5
        %v579 = vmul.f32 %v498, 0.5
        %v580 = vmul.f32 %v502, 0.5
        %v581 = vmul.f32 %v504, 0.5
        %v582 = vmul.f32 %v508, 0.5
        %v583 = vmul.f32 %v510, 0.5
        %v584 = vmul.f32 %v514, 0.5
        %v585 = vmul.f32 %v516, 0.5
        %v586 = vmul.f32 %v520, 0.5
        %v587 = vmul.f32 %v522, 0.5
        %v588 = vmul.f32 %v526, 0.5
        %v589 = vmul.f32 %v528, 0.5
        %v590 = vmul.f32 %v532, 0.5
        %v591 = vmul.f32 %v534, 0.5
        %v592 = vmul.f32 %v538, 0.5
        %v593 = vmul.f32 %v540, 0.5
        %v594 = vmul.f32 %v544, 0.5
        %v595 = vmul.f32 %v546, 0.5
        %v596 = vmul.f32 %v550, 0.5
        %v597 = vmul.f32 %v552, 0.5
        %v598 = vmul.f32 %v556, 0.5
        %v599 = vmul.f32 %v558, 0.5
        %v600 = vmul.f32 %v562, 0.5
        %v601 = vmul.f32 %v564, 0.5
        %v602 = vmul.f32 %v568, 0.5
        %v603 = vmul.f32 %v570, 0.5
        %v604 = vmul.f32 %v478, 0.70710677
        %v605 = vmul.f32 %v480, 0.70710677
        %v606 = vmul.f32 %v484, 0.70710677
        %v607 = vmul.f32 %v486, 0.70710677
        %v608 = vmul.f32 %v490, 0.70710677
        %v609 = vmul.f32 %v492, 0.70710677
        %v610 = vmul.f32 %v496, 0.70710677
        %v611 = vmul.f32 %v498, 0.70710677
        %v612 = vmul.f32 %v502, 0.70710677
        %v613 = vmul.f32 %v504, 0.70710677
        %v614 = vmul.f32 %v508, 0.70710677
        %v615 = vmul.f32 %v510, 0.70710677
        %v616 = vmul.f32 %v514, 0.70710677
        %v617 = vmul.f32 %v516, 0.70710677
        %v618 = vmul.f32 %v520, 0.70710677
        %v619 = vmul.f32 %v522, 0.70710677
        %v620 = vmul.f32 %v526, 0.70710677
        %v621 = vmul.f32 %v528, 0.70710677
        %v622 = vmul.f32 %v532, 0.70710677
        %v623 = vmul.f32 %v534, 0.70710677
        %v624 = vmul.f32 %v538, 0.70710677
        %v625 = vmul.f32 %v540, 0.70710677
        %v626 = vmul.f32 %v544, 0.70710677
        %v627 = vmul.f32 %v546, 0.70710677
        %v628 = vmul.f32 %v550, 0.70710677
        %v629 = vmul.f32 %v552, 0.70710677
        %v630 = vmul.f32 %v556, 0.70710677
        %v631 = vmul.f32 %v558, 0.70710677
        %v632 = vmul.f32 %v562, 0.70710677
        %v633 = vmul.f32 %v564, 0.70710677
        %v634 = vmul.f32 %v568, 0.70710677
        %v635 = vmul.f32 %v570, 0.70710677
        %v636 = verf.f32.pop %v604
        %v637 = verf.f32.pop %v605
        %v638 = verf.f32.pop %v606
        %v639 = verf.f32.pop %v607
        %v640 = verf.f32.pop %v608
        %v641 = verf.f32.pop %v609
        %v642 = verf.f32.pop %v610
        %v643 = verf.f32.pop %v611
        %v644 = verf.f32.pop %v612
        %v645 = verf.f32.pop %v613
        %v646 = verf.f32.pop %v614
        %v647 = verf.f32.pop %v615
        %v648 = verf.f32.pop %v616
        %v649 = verf.f32.pop %v617
        %v650 = verf.f32.pop %v618
        %v651 = verf.f32.pop %v619
        %v652 = verf.f32.pop %v620
        %v653 = verf.f32.pop %v621
        %v654 = verf.f32.pop %v622
        %v655 = verf.f32.pop %v623
        %v656 = verf.f32.pop %v624
        %v657 = verf.f32.pop %v625
        %v658 = verf.f32.pop %v626
        %v659 = verf.f32.pop %v627
        %v660 = verf.f32.pop %v628
        %v661 = verf.f32.pop %v629
        %v662 = verf.f32.pop %v630
        %v663 = verf.f32.pop %v631
        %v664 = verf.f32.pop %v632
        %v665 = verf.f32.pop %v633
        %v666 = verf.f32.pop %v634
        %v667 = verf.f32.pop %v635
        %v668 = vadd.f32 %v636, 1.0
        %v669 = vadd.f32 %v637, 1.0
        %v670 = vadd.f32 %v638, 1.0
        %v671 = vadd.f32 %v639, 1.0
        %v672 = vadd.f32 %v640, 1.0
        %v673 = vadd.f32 %v641, 1.0
        %v674 = vadd.f32 %v642, 1.0
        %v675 = vadd.f32 %v643, 1.0
        %v676 = vadd.f32 %v644, 1.0
        %v677 = vadd.f32 %v645, 1.0
        %v678 = vadd.f32 %v646, 1.0
        %v679 = vadd.f32 %v647, 1.0
        %v680 = vadd.f32 %v648, 1.0
        %v681 = vadd.f32 %v649, 1.0
        %v682 = vadd.f32 %v650, 1.0
        %v683 = vadd.f32 %v651, 1.0
        %v684 = vadd.f32 %v652, 1.0
        %v685 = vadd.f32 %v653, 1.0
        %v686 = vadd.f32 %v654, 1.0
        %v687 = vadd.f32 %v655, 1.0
        %v688 = vadd.f32 %v656, 1.0
        %v689 = vadd.f32 %v657, 1.0
        %v690 = vadd.f32 %v658, 1.0
        %v691 = vadd.f32 %v659, 1.0
        %v692 = vadd.f32 %v660, 1.0
        %v693 = vadd.f32 %v661, 1.0
        %v694 = vadd.f32 %v662, 1.0
        %v695 = vadd.f32 %v663, 1.0
        %v696 = vadd.f32 %v664, 1.0
        %v697 = vadd.f32 %v665, 1.0
        %v698 = vadd.f32 %v666, 1.0
        %v699 = vadd.f32 %v667, 1.0
        %v700 = vmul.f32 %v572, %v668
        %v701 = vmul.f32 %v573, %v669
        %v702 = vmul.f32 %v574, %v670
        %v703 = vmul.f32 %v575, %v671
        %v704 = vmul.f32 %v576, %v672
        %v705 = vmul.f32 %v577, %v673
        %v706 = vmul.f32 %v578, %v674
        %v707 = vmul.f32 %v579, %v675
        %v708 = vmul.f32 %v580, %v676
        %v709 = vmul.f32 %v581, %v677
        %v710 = vmul.f32 %v582, %v678
        %v711 = vmul.f32 %v583, %v679
        %v712 = vmul.f32 %v584, %v680
        %v713 = vmul.f32 %v585, %v681
        %v714 = vmul.f32 %v586, %v682
        %v715 = vmul.f32 %v587, %v683
        %v716 = vmul.f32 %v588, %v684
        %v717 = vmul.f32 %v589, %v685
        %v718 = vmul.f32 %v590, %v686
        %v719 = vmul.f32 %v591, %v687
        %v720 = vmul.f32 %v592, %v688
        %v721 = vmul.f32 %v593, %v689
        %v722 = vmul.f32 %v594, %v690
        %v723 = vmul.f32 %v595, %v691
        %v724 = vmul.f32 %v596, %v692
        %v725 = vmul.f32 %v597, %v693
        %v726 = vmul.f32 %v598, %v694
        %v727 = vmul.f32 %v599, %v695
        %v728 = vmul.f32 %v600, %v696
        %v729 = vmul.f32 %v601, %v697
        %v730 = vmul.f32 %v602, %v698
        %v731 = vmul.f32 %v603, %v699
        %v732 = vld [vmem:[#allocation2] sm:$0xff]
        %v733 = vld [vmem:[#allocation2 + $0x8] sm:$0xff]
        %v734 = vld [vmem:[#allocation2 + $0x10] sm:$0xff]
        %v735 = vld [vmem:[#allocation2 + $0x18] sm:$0xff]
        %v736 = vld [vmem:[#allocation2 + $0x20] sm:$0xff]
        %v737 = vld [vmem:[#allocation2 + $0x28] sm:$0xff]
        %v738 = vld [vmem:[#allocation2 + $0x30] sm:$0xff]
        %v739 = vld [vmem:[#allocation2 + $0x38] sm:$0xff]
        %v740 = vld [vmem:[#allocation2 + $0x40] sm:$0xff]
        %v741 = vld [vmem:[#allocation2 + $0x48] sm:$0xff]
        %v742 = vld [vmem:[#allocation2 + $0x50] sm:$0xff]
        %v743 = vld [vmem:[#allocation2 + $0x58] sm:$0xff]
        %v744 = vld [vmem:[#allocation2 + $0x60] sm:$0xff]
        %v745 = vld [vmem:[#allocation2 + $0x68] sm:$0xff]
        %v746 = vld [vmem:[#allocation2 + $0x70] sm:$0xff]
        %v747 = vld [vmem:[#allocation2 + $0x78] sm:$0xff]
        %v748 = vld [vmem:[%s291] sm:$0xff]
        %v749 = vld [vmem:[%s291 + $0x8] sm:$0xff]
        %v750 = vld [vmem:[%s291 + $0x10] sm:$0xff]
        %v751 = vld [vmem:[%s291 + $0x18] sm:$0xff]
        %v752 = vld [vmem:[%s291 + $0x20] sm:$0xff]
        %v753 = vld [vmem:[%s291 + $0x28] sm:$0xff]
        %v754 = vld [vmem:[%s291 + $0x30] sm:$0xff]
        %v755 = vld [vmem:[%s291 + $0x38] sm:$0xff]
        %v756 = vld [vmem:[%s291 + $0x40] sm:$0xff]
        %v757 = vld [vmem:[%s291 + $0x48] sm:$0xff]
        %v758 = vld [vmem:[%s291 + $0x50] sm:$0xff]
        %v759 = vld [vmem:[%s291 + $0x58] sm:$0xff]
        %v760 = vld [vmem:[%s291 + $0x60] sm:$0xff]
        %v761 = vld [vmem:[%s291 + $0x68] sm:$0xff]
        %v762 = vld [vmem:[%s291 + $0x70] sm:$0xff]
        %v763 = vld [vmem:[%s291 + $0x78] sm:$0xff]
        %v764 = vld [vmem:[%s291 + $0x80] sm:$0xff]
        %v765 = vld [vmem:[%s291 + $0x88] sm:$0xff]
        %v766 = vld [vmem:[%s291 + $0x90] sm:$0xff]
        %v767 = vld [vmem:[%s291 + $0x98] sm:$0xff]
        %v768 = vld [vmem:[%s291 + $0xa0] sm:$0xff]
        %v769 = vld [vmem:[%s291 + $0xa8] sm:$0xff]
        %v770 = vld [vmem:[%s291 + $0xb0] sm:$0xff]
        %v771 = vld [vmem:[%s291 + $0xb8] sm:$0xff]
        %v772 = vld [vmem:[%s291 + $0xc0] sm:$0xff]
        %v773 = vld [vmem:[%s291 + $0xc8] sm:$0xff]
        %v774 = vld [vmem:[%s291 + $0xd0] sm:$0xff]
        %v775 = vld [vmem:[%s291 + $0xd8] sm:$0xff]
        %v776 = vld [vmem:[%s291 + $0xe0] sm:$0xff]
        %v777 = vld [vmem:[%s291 + $0xe8] sm:$0xff]
        %v778 = vld [vmem:[%s291 + $0xf0] sm:$0xff]
        %v779 = vld [vmem:[%s291 + $0xf8] sm:$0xff]
        %780 = vmatprep.subr.mxu0 0.0
        %781 = vmatpush1.msra.mxu0 %v763
        %782 = vmatprep.subr.mxu0 0.0
        %783 = vmatpush1.msra.mxu0 %v762
        %784 = vmatprep.subr.mxu0 0.0
        %785 = vmatpush1.msra.mxu0 %v761
        %786 = vmatprep.subr.mxu0 0.0
        %787 = vmatpush1.msra.mxu0 %v760
        %788 = vmatprep.subr.mxu0 0.0
        %789 = vmatpush1.msra.mxu0 %v759
        %790 = vmatprep.subr.mxu0 0.0
        %791 = vmatpush1.msra.mxu0 %v758
        %792 = vmatprep.subr.mxu0 0.0
        %793 = vmatpush1.msra.mxu0 %v757
        %794 = vmatprep.subr.mxu0 0.0
        %795 = vmatpush1.msra.mxu0 %v756
        %796 = vmatprep.subr.mxu0 0.0
        %797 = vmatpush1.msra.mxu0 %v755
        %798 = vmatprep.subr.mxu0 0.0
        %799 = vmatpush1.msra.mxu0 %v754
        %800 = vmatprep.subr.mxu0 0.0
        %801 = vmatpush1.msra.mxu0 %v753
        %802 = vmatprep.subr.mxu0 0.0
        %803 = vmatpush1.msra.mxu0 %v752
        %804 = vmatprep.subr.mxu0 0.0
        %805 = vmatpush1.msra.mxu0 %v751
        %806 = vmatprep.subr.mxu0 0.0
        %807 = vmatpush1.msra.mxu0 %v750
        %808 = vmatprep.subr.mxu0 0.0
        %809 = vmatpush1.msra.mxu0 %v749
        %810 = vmatprep.subr.mxu0 0.0
        %811 = vmatpush1.msra.mxu0 %v748
        %812 = vmatprep.subr.mxu0 0.0
        %813 = vmatpush2.msra.mxu0 %v779
        %814 = vmatprep.subr.mxu0 0.0
        %815 = vmatpush2.msra.mxu0 %v778
        %816 = vmatprep.subr.mxu0 0.0
        %817 = vmatpush2.msra.mxu0 %v777
        %818 = vmatprep.subr.mxu0 0.0
        %819 = vmatpush2.msra.mxu0 %v776
        %820 = vmatprep.subr.mxu0 0.0
        %821 = vmatpush2.msra.mxu0 %v775
        %822 = vmatprep.subr.mxu0 0.0
        %823 = vmatpush2.msra.mxu0 %v774
        %824 = vmatprep.subr.mxu0 0.0
        %825 = vmatpush2.msra.mxu0 %v773
        %826 = vmatprep.subr.mxu0 0.0
        %827 = vmatpush2.msra.mxu0 %v772
        %828 = vmatprep.subr.mxu0 0.0
        %829 = vmatpush2.msra.mxu0 %v771
        %830 = vmatprep.subr.mxu0 0.0
        %831 = vmatpush2.msra.mxu0 %v770
        %832 = vmatprep.subr.mxu0 0.0
        %833 = vmatpush2.msra.mxu0 %v769
        %834 = vmatprep.subr.mxu0 0.0
        %835 = vmatpush2.msra.mxu0 %v768
        %836 = vmatprep.subr.mxu0 0.0
        %837 = vmatpush2.msra.mxu0 %v767
        %838 = vmatprep.subr.mxu0 0.0
        %839 = vmatpush2.msra.mxu0 %v766
        %840 = vmatprep.subr.mxu0 0.0
        %841 = vmatpush2.msra.mxu0 %v765
        %842 = vmatprep.subr.mxu0 0.0
        %843 = vmatpush2.msra.mxu0 %v764
        %844 = vmatprep.mubr.f32.mxu0 %v701
        %845 = vmatmul.mubr.f32.gmra.mxu0 %v700
        %v846 = vpop.f32.mrf.mxu0
        %v847 = vadd.f32 0.0, %v846
        %v848 = vpop.f32.mrf.mxu0
        %849 = vmatprep.mubr.f32.mxu0 %v703
        %850 = vmatmul.mubr.f32.gmra.mxu0 %v702
        %v851 = vpop.f32.mrf.mxu0
        %v852 = vadd.f32 0.0, %v851
        %v853 = vpop.f32.mrf.mxu0
        %854 = vmatprep.mubr.f32.mxu0 %v705
        %855 = vmatmul.mubr.f32.gmra.mxu0 %v704
        %v856 = vpop.f32.mrf.mxu0
        %v857 = vadd.f32 0.0, %v856
        %v858 = vpop.f32.mrf.mxu0
        %859 = vmatprep.mubr.f32.mxu0 %v707
        %860 = vmatmul.mubr.f32.gmra.mxu0 %v706
        %v861 = vpop.f32.mrf.mxu0
        %v862 = vadd.f32 0.0, %v861
        %v863 = vpop.f32.mrf.mxu0
        %864 = vmatprep.mubr.f32.mxu0 %v709
        %865 = vmatmul.mubr.f32.gmra.mxu0 %v708
        %v866 = vpop.f32.mrf.mxu0
        %v867 = vadd.f32 0.0, %v866
        %v868 = vpop.f32.mrf.mxu0
        %869 = vmatprep.mubr.f32.mxu0 %v711
        %870 = vmatmul.mubr.f32.gmra.mxu0 %v710
        %v871 = vpop.f32.mrf.mxu0
        %v872 = vadd.f32 0.0, %v871
        %v873 = vpop.f32.mrf.mxu0
        %874 = vmatprep.mubr.f32.mxu0 %v713
        %875 = vmatmul.mubr.f32.gmra.mxu0 %v712
        %v876 = vpop.f32.mrf.mxu0
        %v877 = vadd.f32 0.0, %v876
        %v878 = vpop.f32.mrf.mxu0
        %879 = vmatprep.mubr.f32.mxu0 %v715
        %880 = vmatmul.mubr.f32.gmra.mxu0 %v714
        %v881 = vpop.f32.mrf.mxu0
        %v882 = vadd.f32 0.0, %v881
        %v883 = vpop.f32.mrf.mxu0
        %884 = vmatprep.mubr.f32.mxu0 %v717
        %885 = vmatmul.mubr.f32.gmra.mxu0 %v716
        %v886 = vpop.f32.mrf.mxu0
        %v887 = vadd.f32 0.0, %v886
        %v888 = vpop.f32.mrf.mxu0
        %889 = vmatprep.mubr.f32.mxu0 %v719
        %890 = vmatmul.mubr.f32.gmra.mxu0 %v718
        %v891 = vpop.f32.mrf.mxu0
        %v892 = vadd.f32 0.0, %v891
        %v893 = vpop.f32.mrf.mxu0
        %894 = vmatprep.mubr.f32.mxu0 %v721
        %895 = vmatmul.mubr.f32.gmra.mxu0 %v720
        %v896 = vpop.f32.mrf.mxu0
        %v897 = vadd.f32 0.0, %v896
        %v898 = vpop.f32.mrf.mxu0
        %899 = vmatprep.mubr.f32.mxu0 %v723
        %900 = vmatmul.mubr.f32.gmra.mxu0 %v722
        %v901 = vpop.f32.mrf.mxu0
        %v902 = vadd.f32 0.0, %v901
        %v903 = vpop.f32.mrf.mxu0
        %904 = vmatprep.mubr.f32.mxu0 %v725
        %905 = vmatmul.mubr.f32.gmra.mxu0 %v724
        %v906 = vpop.f32.mrf.mxu0
        %v907 = vadd.f32 0.0, %v906
        %v908 = vpop.f32.mrf.mxu0
        %909 = vmatprep.mubr.f32.mxu0 %v727
        %910 = vmatmul.mubr.f32.gmra.mxu0 %v726
        %v911 = vpop.f32.mrf.mxu0
        %v912 = vadd.f32 0.0, %v911
        %v913 = vpop.f32.mrf.mxu0
        %914 = vmatprep.mubr.f32.mxu0 %v729
        %915 = vmatmul.mubr.f32.gmra.mxu0 %v728
        %v916 = vpop.f32.mrf.mxu0
        %v917 = vadd.f32 0.0, %v916
        %v918 = vpop.f32.mrf.mxu0
        %919 = vmatprep.mubr.f32.mxu0 %v731
        %920 = vmatmul.mubr.f32.gmra.mxu0 %v730
        %v921 = vpop.f32.mrf.mxu0
        %v922 = vadd.f32 0.0, %v921
        %v923 = vpop.f32.mrf.mxu0
        %924 = vdwg.mxu0
        %v925 = vadd.f32 %v732, %v847
        %v926 = vadd.f32 %v733, %v852
        %v927 = vadd.f32 %v734, %v857
        %v928 = vadd.f32 %v735, %v862
        %v929 = vadd.f32 %v736, %v867
        %v930 = vadd.f32 %v737, %v872
        %v931 = vadd.f32 %v738, %v877
        %v932 = vadd.f32 %v739, %v882
        %v933 = vadd.f32 %v740, %v887
        %v934 = vadd.f32 %v741, %v892
        %v935 = vadd.f32 %v742, %v897
        %v936 = vadd.f32 %v743, %v902
        %v937 = vadd.f32 %v744, %v907
        %v938 = vadd.f32 %v745, %v912
        %v939 = vadd.f32 %v746, %v917
        %v940 = vadd.f32 %v747, %v922
        %941 = vst [vmem:[#allocation2] sm:$0xff] %v925
        %942 = vst [vmem:[#allocation2 + $0x8] sm:$0xff] %v926
        %943 = vst [vmem:[#allocation2 + $0x10] sm:$0xff] %v927
        %944 = vst [vmem:[#allocation2 + $0x18] sm:$0xff] %v928
        %945 = vst [vmem:[#allocation2 + $0x20] sm:$0xff] %v929
        %946 = vst [vmem:[#allocation2 + $0x28] sm:$0xff] %v930
        %947 = vst [vmem:[#allocation2 + $0x30] sm:$0xff] %v931
        %948 = vst [vmem:[#allocation2 + $0x38] sm:$0xff] %v932
        %949 = vst [vmem:[#allocation2 + $0x40] sm:$0xff] %v933
        %950 = vst [vmem:[#allocation2 + $0x48] sm:$0xff] %v934
        %951 = vst [vmem:[#allocation2 + $0x50] sm:$0xff] %v935
        %952 = vst [vmem:[#allocation2 + $0x58] sm:$0xff] %v936
        %953 = vst [vmem:[#allocation2 + $0x60] sm:$0xff] %v937
        %954 = vst [vmem:[#allocation2 + $0x68] sm:$0xff] %v938
        %955 = vst [vmem:[#allocation2 + $0x70] sm:$0xff] %v939
        %956 = vst [vmem:[#allocation2 + $0x78] sm:$0xff] %v940
        %p957 = scmp.eq.s32.totalorder %s26, 1
        // Predicated region
        $region57: #{mlp_forward.1} parent=39 // pred_check
          %p958 = pneg %p957
        $region58: #{mlp_forward.1} parent=39 // pred_check_branch
          %960 = sbr.rel (%p958) target = $region60
        $region59: #{mlp_forward.1} parent=39 // pred_region
          %v961 = vld [vmem:[#allocation2] sm:$0xff]
          %v962 = vld [vmem:[#allocation2 + $0x8] sm:$0xff]
          %v963 = vld [vmem:[#allocation2 + $0x10] sm:$0xff]
          %v964 = vld [vmem:[#allocation2 + $0x18] sm:$0xff]
          %v965 = vld [vmem:[#allocation2 + $0x20] sm:$0xff]
          %v966 = vld [vmem:[#allocation2 + $0x28] sm:$0xff]
          %v967 = vld [vmem:[#allocation2 + $0x30] sm:$0xff]
          %v968 = vld [vmem:[#allocation2 + $0x38] sm:$0xff]
          %v969 = vld [vmem:[#allocation2 + $0x40] sm:$0xff]
          %v970 = vld [vmem:[#allocation2 + $0x48] sm:$0xff]
          %v971 = vld [vmem:[#allocation2 + $0x50] sm:$0xff]
          %v972 = vld [vmem:[#allocation2 + $0x58] sm:$0xff]
          %v973 = vld [vmem:[#allocation2 + $0x60] sm:$0xff]
          %v974 = vld [vmem:[#allocation2 + $0x68] sm:$0xff]
          %v975 = vld [vmem:[#allocation2 + $0x70] sm:$0xff]
          %v976 = vld [vmem:[#allocation2 + $0x78] sm:$0xff]
          %v977 = vld [vmem:[%s4] sm:$0x1]
          %v979 = vlaneseq
          %v980 = vshrl.u32 %v979, 7
          %v981 = vsub.s32 0, %v980
          %v982 = vrot.slane %v977, %v981
          %v984 = vadd.f32 %v961, %v982
          %v985 = vadd.f32 %v962, %v982
          %v986 = vadd.f32 %v963, %v982
          %v987 = vadd.f32 %v964, %v982
          %v988 = vadd.f32 %v965, %v982
          %v989 = vadd.f32 %v966, %v982
          %v990 = vadd.f32 %v967, %v982
          %v991 = vadd.f32 %v968, %v982
          %v992 = vadd.f32 %v969, %v982
          %v993 = vadd.f32 %v970, %v982
          %v994 = vadd.f32 %v971, %v982
          %v995 = vadd.f32 %v972, %v982
          %v996 = vadd.f32 %v973, %v982
          %v997 = vadd.f32 %v974, %v982
          %v998 = vadd.f32 %v975, %v982
          %v999 = vadd.f32 %v976, %v982
          %v1000 = vmul.f32 %v984, 0.5
          %v1001 = vmul.f32 %v985, 0.5
          %v1002 = vmul.f32 %v986, 0.5
          %v1003 = vmul.f32 %v987, 0.5
          %v1004 = vmul.f32 %v988, 0.5
          %v1005 = vmul.f32 %v989, 0.5
          %v1006 = vmul.f32 %v990, 0.5
          %v1007 = vmul.f32 %v991, 0.5
          %v1008 = vmul.f32 %v992, 0.5
          %v1009 = vmul.f32 %v993, 0.5
          %v1010 = vmul.f32 %v994, 0.5
          %v1011 = vmul.f32 %v995, 0.5
          %v1012 = vmul.f32 %v996, 0.5
          %v1013 = vmul.f32 %v997, 0.5
          %v1014 = vmul.f32 %v998, 0.5
          %v1015 = vmul.f32 %v999, 0.5
          %v1016 = vmul.f32 %v984, 0.70710677
          %v1017 = vmul.f32 %v985, 0.70710677
          %v1018 = vmul.f32 %v986, 0.70710677
          %v1019 = vmul.f32 %v987, 0.70710677
          %v1020 = vmul.f32 %v988, 0.70710677
          %v1021 = vmul.f32 %v989, 0.70710677
          %v1022 = vmul.f32 %v990, 0.70710677
          %v1023 = vmul.f32 %v991, 0.70710677
          %v1024 = vmul.f32 %v992, 0.70710677
          %v1025 = vmul.f32 %v993, 0.70710677
          %v1026 = vmul.f32 %v994, 0.70710677
          %v1027 = vmul.f32 %v995, 0.70710677
          %v1028 = vmul.f32 %v996, 0.70710677
          %v1029 = vmul.f32 %v997, 0.70710677
          %v1030 = vmul.f32 %v998, 0.70710677
          %v1031 = vmul.f32 %v999, 0.70710677
          %v1032 = verf.f32.pop %v1016
          %v1033 = verf.f32.pop %v1017
          %v1034 = verf.f32.pop %v1018
          %v1035 = verf.f32.pop %v1019
          %v1036 = verf.f32.pop %v1020
          %v1037 = verf.f32.pop %v1021
          %v1038 = verf.f32.pop %v1022
          %v1039 = verf.f32.pop %v1023
          %v1040 = verf.f32.pop %v1024
          %v1041 = verf.f32.pop %v1025
          %v1042 = verf.f32.pop %v1026
          %v1043 = verf.f32.pop %v1027
          %v1044 = verf.f32.pop %v1028
          %v1045 = verf.f32.pop %v1029
          %v1046 = verf.f32.pop %v1030
          %v1047 = verf.f32.pop %v1031
          %v1048 = vadd.f32 %v1032, 1.0
          %v1049 = vadd.f32 %v1033, 1.0
          %v1050 = vadd.f32 %v1034, 1.0
          %v1051 = vadd.f32 %v1035, 1.0
          %v1052 = vadd.f32 %v1036, 1.0
          %v1053 = vadd.f32 %v1037, 1.0
          %v1054 = vadd.f32 %v1038, 1.0
          %v1055 = vadd.f32 %v1039, 1.0
          %v1056 = vadd.f32 %v1040, 1.0
          %v1057 = vadd.f32 %v1041, 1.0
          %v1058 = vadd.f32 %v1042, 1.0
          %v1059 = vadd.f32 %v1043, 1.0
          %v1060 = vadd.f32 %v1044, 1.0
          %v1061 = vadd.f32 %v1045, 1.0
          %v1062 = vadd.f32 %v1046, 1.0
          %v1063 = vadd.f32 %v1047, 1.0
          %v1064 = vmul.f32 %v1000, %v1048
          %v1065 = vmul.f32 %v1001, %v1049
          %v1066 = vmul.f32 %v1002, %v1050
          %v1067 = vmul.f32 %v1003, %v1051
          %v1068 = vmul.f32 %v1004, %v1052
          %v1069 = vmul.f32 %v1005, %v1053
          %v1070 = vmul.f32 %v1006, %v1054
          %v1071 = vmul.f32 %v1007, %v1055
          %v1072 = vmul.f32 %v1008, %v1056
          %v1073 = vmul.f32 %v1009, %v1057
          %v1074 = vmul.f32 %v1010, %v1058
          %v1075 = vmul.f32 %v1011, %v1059
          %v1076 = vmul.f32 %v1012, %v1060
          %v1077 = vmul.f32 %v1013, %v1061
          %v1078 = vmul.f32 %v1014, %v1062
          %v1079 = vmul.f32 %v1015, %v1063
          %1080 = vst [vmem:[#allocation9] sm:$0xff] %v1064
          %1081 = vst [vmem:[#allocation9 + $0x8] sm:$0xff] %v1065
          %1082 = vst [vmem:[#allocation9 + $0x10] sm:$0xff] %v1066
          %1083 = vst [vmem:[#allocation9 + $0x18] sm:$0xff] %v1067
          %1084 = vst [vmem:[#allocation9 + $0x20] sm:$0xff] %v1068
          %1085 = vst [vmem:[#allocation9 + $0x28] sm:$0xff] %v1069
          %1086 = vst [vmem:[#allocation9 + $0x30] sm:$0xff] %v1070
          %1087 = vst [vmem:[#allocation9 + $0x38] sm:$0xff] %v1071
          %1088 = vst [vmem:[#allocation9 + $0x40] sm:$0xff] %v1072
          %1089 = vst [vmem:[#allocation9 + $0x48] sm:$0xff] %v1073
          %1090 = vst [vmem:[#allocation9 + $0x50] sm:$0xff] %v1074
          %1091 = vst [vmem:[#allocation9 + $0x58] sm:$0xff] %v1075
          %1092 = vst [vmem:[#allocation9 + $0x60] sm:$0xff] %v1076
          %1093 = vst [vmem:[#allocation9 + $0x68] sm:$0xff] %v1077
          %1094 = vst [vmem:[#allocation9 + $0x70] sm:$0xff] %v1078
          %1095 = vst [vmem:[#allocation9 + $0x78] sm:$0xff] %v1079
        $region60: #{mlp_forward.1} parent=39 // pred_fallthru
          _
        // Predicated region
        $region61: #{mlp_forward.1} parent=39 // pred_check
          %p1096 = pneg %p176
        $region62: #{mlp_forward.1} parent=39 // pred_check_branch
          %1098 = sbr.rel (%p1096) target = $region64
        $region63: #{mlp_forward.1} parent=39 // pred_region
          %s1099 = smul.u32 16, %s25
          %s1101 = ssub.s32 2048, 2048
          %1102 = vsyncadd [#allocation5], %s1101
          %s1103 = smul.addr %s1099, 128
          %s1104 = scalar_lea.hbm %s5, %s1103
          %s1105 = sshll.u32 [#allocation9], 4
          %s1106 = int_to_ptr.vmem [resolvable:$true] %s1105
          %1111 = dma.vmem_to_hbm [thread:$0]  %s1106, 2048, %s1104, [#allocation5], 128, 128, 8
        $region64: #{mlp_forward.1} parent=39 // pred_fallthru
          _
        // Predicated region
        $region65: #{mlp_forward.1} parent=39 // pred_check
          %p1112 = pneg %p176
        $region66: #{mlp_forward.1} parent=39 // pred_check_branch
          %1114 = sbr.rel (%p1112) target = $region68
        $region67: #{mlp_forward.1} parent=39 // pred_region
          %1115 = dma.done [#allocation5], 2048
        $region68: #{mlp_forward.1} parent=39 // pred_fallthru
          _
      $region40: #{mlp_forward.1} parent=5 // pred_fallthru
        _
      %p1116 = scmp.le.s32.totalorder 2, %s16
      // Predicated region
      $region69: #{mlp_forward.1} parent=5 // pred_check
        %p1117 = pneg %p1116
      $region70: #{mlp_forward.1} parent=5 // pred_check_branch
        %1119 = sbr.rel (%p1117) target = $region72
      $region71: #{mlp_forward.1} parent=5 // pred_region
        %s1120 = ssub.s32 %s16, 2
      $region72: #{mlp_forward.1} parent=5 // pred_fallthru
        _
    $region6: #{mlp_forward.1} parent=1 // loop_footer
      %s20 = sadd.s32 1, %s16
    $region7: #{mlp_forward.1} parent=1 // loop_footer_branch
      %15 = sbr.rel target = $region3
    $region8: #{mlp_forward.1} parent=1 // loop_exit
      _
    %1121 = vsyncpa [#allocation4], 1
    %s1122 = scalar_lea.sflag [#allocation4], 1
    %1123 = vsyncpa %s1122, 1
    %1124 = vsyncpa [#allocation7], 1
    %s1125 = scalar_lea.sflag [#allocation7], 1
    %1126 = vsyncpa %s1125, 1
    %1127 = vsyncpa [#allocation5], 1
    %s1128 = scalar_lea.sflag [#allocation5], 1
    %1129 = vsyncpa %s1128, 1

</llo_original>
